<compile_context>
chip_gen: v7x
topology: tpu7x:2x2x1
jax: 0.10.0
libtpu: 0.0.40
codegen_flags: <defaults>
</compile_context>

<pallas_src>
import jax
import jax.numpy as jnp
from jax.experimental import pallas as pl
from jax.experimental.pallas import tpu as pltpu

N_STATES = 4
N_ACTIONS = 2
HIDDEN = 128

N_STATES_PAD = 8     # pad 4 -> 8 so w1 is a clean f32-tileable (8,128) operand
N_ACTIONS_PAD = 8    # pad 2 -> 8; f32 output, 16x fewer HBM bytes than 128 lanes
MAX_BLOCK_B = 1024   # per-grid-step batch rows (well under VMEM limits everywhere)


def _round_up(x, m):
    return ((x + m - 1) // m) * m


def _pick_block_b(batch):
    """Batch rows per grid step.

    - batch <= 512: a single grid step covers the whole batch (per-step pipeline
      overhead ~0.35us would dominate this sub-us kernel), rows rounded to a
      multiple of 8.
    - larger batches: cap blocks at MAX_BLOCK_B but keep >= 2 blocks so the
      "parallel" batch axis actually splits across v7x's two TensorCores.
    """
    if batch <= 512:
        return _round_up(max(batch, 8), 8)
    return min(MAX_BLOCK_B, _round_up(pl.cdiv(batch, 2), 8))


def dqn_mlp_kernel(x_ref, w1_ref, b1_ref, w2_ref, b2_ref, w3_ref, b3_ref, o_ref):
    # Uniform bf16 MXU feed, f32 accumulation; bias-add + ReLU in f32, then the
    # activation is immediately narrowed back to bf16 so only the bf16 copy
    # stays live between layers.
    x = x_ref[...].astype(jnp.bfloat16)                              # (BLOCK_B, 8)

    h1 = jnp.dot(x, w1_ref[...], preferred_element_type=jnp.float32) + b1_ref[...]
    h1 = jnp.maximum(h1, 0.0).astype(jnp.bfloat16)                   # (BLOCK_B, 128)

    h2 = jnp.dot(h1, w2_ref[...], preferred_element_type=jnp.float32) + b2_ref[...]
    h2 = jnp.maximum(h2, 0.0).astype(jnp.bfloat16)                   # (BLOCK_B, 128)

    q = jnp.dot(h2, w3_ref[...], preferred_element_type=jnp.float32) + b3_ref[...]
    o_ref[...] = q.astype(o_ref.dtype)                               # (BLOCK_B, 8) f32


@jax.jit
def dqn_forward(x, params):
    """x: (B, N_STATES) float32 -> (B, N_ACTIONS) float32."""
    w1, b1, w2, b2, w3, b3 = params
    B = x.shape[0]
    block_b = _pick_block_b(B)
    n_blocks = pl.cdiv(B, block_b)
    B_pad = n_blocks * block_b

    # Single fused zero-pad: batch -> B_pad rows, features 4 -> 8.
    x_pad = jnp.pad(x, ((0, B_pad - B), (0, N_STATES_PAD - N_STATES)))

    # Weights/biases are grid-invariant (constant index_map) so they stay
    # VMEM-resident across grid steps.
    # TODO(synk): single-buffer them via pipeline_mode=pl.Buffered(1) once that
    # is confirmed supported for grid-invariant operands; the ~70 KiB of extra
    # VMEM from double-buffering is non-critical at these sizes.
    full = lambda a: pl.BlockSpec(a.shape, lambda i: (0,) * a.ndim)

    flops = 2 * B_pad * (N_STATES_PAD * HIDDEN + HIDDEN * HIDDEN + HIDDEN * N_ACTIONS_PAD)
    bytes_accessed = (x_pad.size * 4
                      + (w1.size + w2.size + w3.size) * 2            # bf16 weights
                      + (b1.size + b2.size + b3.size) * 4            # f32 biases
                      + B_pad * N_ACTIONS_PAD * 4)                   # f32 output

    out = pl.pallas_call(
        dqn_mlp_kernel,
        out_shape=jax.ShapeDtypeStruct((B_pad, N_ACTIONS_PAD), jnp.float32),
        grid_spec=pltpu.PrefetchScalarGridSpec(
            num_scalar_prefetch=0,
            grid=(n_blocks,),
            in_specs=[
                pl.BlockSpec((block_b, N_STATES_PAD), lambda i: (i, 0)),
                full(w1), full(b1), full(w2), full(b2), full(w3), full(b3),
            ],
            out_specs=pl.BlockSpec((block_b, N_ACTIONS_PAD), lambda i: (i, 0)),
        ),
        compiler_params=pltpu.CompilerParams(
            dimension_semantics=("parallel",)),
        cost_estimate=pl.CostEstimate(flops=flops, transcendentals=0,
                                      bytes_accessed=bytes_accessed),
    )(x_pad, w1, b1, w2, b2, w3, b3)

    # Strip batch padding and the padded output columns.
    return out[:B, :N_ACTIONS]


def init_params(key):
    """Deterministic init mirroring nn.Linear (weights stored as (in, out)),
    padded / cast for the TPU layout described above.  Weights are bf16 (MXU
    feed precision); biases stay f32."""
    k1, k2, k3, k4, k5, k6 = jax.random.split(key, 6)

    def uniform(k, shape, fan_in):
        bound = 1.0 / jnp.sqrt(fan_in)
        return jax.random.uniform(k, shape, jnp.float32, -bound, bound)

    w1 = uniform(k1, (N_STATES, HIDDEN), N_STATES)
    b1 = uniform(k2, (1, HIDDEN), N_STATES)
    w2 = uniform(k3, (HIDDEN, HIDDEN), HIDDEN)
    b2 = uniform(k4, (1, HIDDEN), HIDDEN)
    w3 = uniform(k5, (HIDDEN, N_ACTIONS), HIDDEN)
    b3 = uniform(k6, (1, N_ACTIONS), HIDDEN)

    # Zero-pad w1 rows 4..7 and w3/b3 columns 2..7; weights -> bf16.
    w1_p = jnp.zeros((N_STATES_PAD, HIDDEN), jnp.float32).at[:N_STATES, :].set(w1)
    w3_p = jnp.zeros((HIDDEN, N_ACTIONS_PAD), jnp.float32).at[:, :N_ACTIONS].set(w3)
    b3_p = jnp.zeros((1, N_ACTIONS_PAD), jnp.float32).at[:, :N_ACTIONS].set(b3)

    return (w1_p.astype(jnp.bfloat16), b1,
            w2.astype(jnp.bfloat16), b2,
            w3_p.astype(jnp.bfloat16), b3_p)


def reference_forward(x, params):
    """Pure-JAX reference performing the same padded / mixed-precision math
    (bf16 MXU feed, f32 accumulation, f32 bias + ReLU)."""
    w1, b1, w2, b2, w3, b3 = params
    x_pad = jnp.pad(x, ((0, 0), (0, N_STATES_PAD - N_STATES))).astype(jnp.bfloat16)
    h1 = jnp.maximum(
        jnp.dot(x_pad, w1, preferred_element_type=jnp.float32) + b1, 0.0).astype(jnp.bfloat16)
    h2 = jnp.maximum(
        jnp.dot(h1, w2, preferred_element_type=jnp.float32) + b2, 0.0).astype(jnp.bfloat16)
    q = jnp.dot(h2, w3, preferred_element_type=jnp.float32) + b3
    return q[:, :N_ACTIONS]


if __name__ == "__main__":
    key = jax.random.PRNGKey(0)
    kx, kp = jax.random.split(key)
    params = init_params(kp)

    # B=8: single tiny block; B=260: one 264-row block with batch padding;
    # B=600: two 304-row blocks (exercises the multi-block / megacore path).
    for B in (8, 260, 600):
        x = jax.random.normal(jax.random.fold_in(kx, B), (B, N_STATES), jnp.float32)
        out = jax.block_until_ready(dqn_forward(x, params))
        ref = reference_forward(x, params)
        assert out.shape == (B, N_ACTIONS)
        assert jnp.allclose(out, ref, atol=2e-3, rtol=2e-3), "mismatch vs reference"
    print("KERNEL_OK")
</pallas_src>

<mosaic_0001>
module attributes {stable_mosaic.version = 11 : i64} {
  func.func @dqn_mlp_kernel(%arg0: i32, %arg1: memref<8x8xf32, #tpu.memory_space<vmem>>, %arg2: memref<8x128xbf16, #tpu.memory_space<vmem>>, %arg3: memref<1x128xf32, #tpu.memory_space<vmem>>, %arg4: memref<128x128xbf16, #tpu.memory_space<vmem>>, %arg5: memref<1x128xf32, #tpu.memory_space<vmem>>, %arg6: memref<128x8xbf16, #tpu.memory_space<vmem>>, %arg7: memref<1x8xf32, #tpu.memory_space<vmem>>, %arg8: memref<8x8xf32, #tpu.memory_space<vmem>>) attributes {dimension_semantics = [#tpu.dimension_semantics<parallel>], iteration_bounds = array<i64: 1>, scalar_prefetch = 0 : i64, scratch_operands = 0 : i64, tpu.core_type = #tpu.core_type<tc>, window_params = [{transform_indices = @transform_0, window_bounds = array<i64: 8, 8>}, {pipeline_mode = #tpu.pipeline_mode<synchronous>, transform_indices = @transform_1, window_bounds = array<i64: 8, 128>}, {pipeline_mode = #tpu.pipeline_mode<synchronous>, transform_indices = @transform_2, window_bounds = array<i64: 1, 128>}, {pipeline_mode = #tpu.pipeline_mode<synchronous>, transform_indices = @transform_3, window_bounds = array<i64: 128, 128>}, {pipeline_mode = #tpu.pipeline_mode<synchronous>, transform_indices = @transform_4, window_bounds = array<i64: 1, 128>}, {pipeline_mode = #tpu.pipeline_mode<synchronous>, transform_indices = @transform_5, window_bounds = array<i64: 128, 8>}, {pipeline_mode = #tpu.pipeline_mode<synchronous>, transform_indices = @transform_6, window_bounds = array<i64: 1, 8>}, {transform_indices = @transform_7, window_bounds = array<i64: 8, 8>}]} {
    %c0 = arith.constant 0 : index
    %c0_0 = arith.constant 0 : index
    %0 = vector.load %arg1[%c0, %c0_0] : memref<8x8xf32, #tpu.memory_space<vmem>>, vector<8x8xf32>
    %1 = arith.truncf %0 : vector<8x8xf32> to vector<8x8xbf16>
    %c0_1 = arith.constant 0 : index
    %c0_2 = arith.constant 0 : index
    %2 = vector.load %arg2[%c0_1, %c0_2] : memref<8x128xbf16, #tpu.memory_space<vmem>>, vector<8x128xbf16>
    %cst = arith.constant dense<0.000000e+00> : vector<8x128xf32>
    %3 = tpu.matmul %1, %2, %cst {dimension_numbers = #tpu.dot_dimension_numbers<[1], [0], [0], [1], [0, 0, 1, 1], [], []>} : vector<8x8xbf16>, vector<8x128xbf16>, vector<8x128xf32> -> vector<8x128xf32>
    %c0_3 = arith.constant 0 : index
    %c0_4 = arith.constant 0 : index
    %4 = vector.load %arg3[%c0_3, %c0_4] : memref<1x128xf32, #tpu.memory_space<vmem>>, vector<1x128xf32>
    %5 = vector.broadcast %4 : vector<1x128xf32> to vector<8x128xf32>
    %6 = arith.addf %3, %5 : vector<8x128xf32>
    %cst_5 = arith.constant 0.000000e+00 : f32
    %7 = vector.broadcast %cst_5 : f32 to vector<8x128xf32>
    %8 = arith.maximumf %6, %7 : vector<8x128xf32>
    %9 = arith.truncf %8 : vector<8x128xf32> to vector<8x128xbf16>
    %c0_6 = arith.constant 0 : index
    %c0_7 = arith.constant 0 : index
    %10 = vector.load %arg4[%c0_6, %c0_7] : memref<128x128xbf16, #tpu.memory_space<vmem>>, vector<128x128xbf16>
    %cst_8 = arith.constant dense<0.000000e+00> : vector<8x128xf32>
    %11 = tpu.matmul %9, %10, %cst_8 {dimension_numbers = #tpu.dot_dimension_numbers<[1], [0], [0], [1], [0, 0, 1, 1], [], []>} : vector<8x128xbf16>, vector<128x128xbf16>, vector<8x128xf32> -> vector<8x128xf32>
    %c0_9 = arith.constant 0 : index
    %c0_10 = arith.constant 0 : index
    %12 = vector.load %arg5[%c0_9, %c0_10] : memref<1x128xf32, #tpu.memory_space<vmem>>, vector<1x128xf32>
    %13 = vector.broadcast %12 : vector<1x128xf32> to vector<8x128xf32>
    %14 = arith.addf %11, %13 : vector<8x128xf32>
    %cst_11 = arith.constant 0.000000e+00 : f32
    %15 = vector.broadcast %cst_11 : f32 to vector<8x128xf32>
    %16 = arith.maximumf %14, %15 : vector<8x128xf32>
    %17 = arith.truncf %16 : vector<8x128xf32> to vector<8x128xbf16>
    %c0_12 = arith.constant 0 : index
    %c0_13 = arith.constant 0 : index
    %18 = vector.load %arg6[%c0_12, %c0_13] : memref<128x8xbf16, #tpu.memory_space<vmem>>, vector<128x8xbf16>
    %cst_14 = arith.constant dense<0.000000e+00> : vector<8x8xf32>
    %19 = tpu.matmul %17, %18, %cst_14 {dimension_numbers = #tpu.dot_dimension_numbers<[1], [0], [0], [1], [0, 0, 1, 1], [], []>} : vector<8x128xbf16>, vector<128x8xbf16>, vector<8x8xf32> -> vector<8x8xf32>
    %c0_15 = arith.constant 0 : index
    %c0_16 = arith.constant 0 : index
    %20 = vector.load %arg7[%c0_15, %c0_16] : memref<1x8xf32, #tpu.memory_space<vmem>>, vector<1x8xf32>
    %21 = vector.broadcast %20 : vector<1x8xf32> to vector<8x8xf32>
    %22 = arith.addf %19, %21 : vector<8x8xf32>
    %c0_17 = arith.constant 0 : index
    %c0_18 = arith.constant 0 : index
    %23 = vector.load %arg8[%c0_17, %c0_18] : memref<8x8xf32, #tpu.memory_space<vmem>>, vector<8x8xf32>
    tpu.vector_store %arg8[%c0_17, %c0_18], %22 {strides = array<i32>} : memref<8x8xf32, #tpu.memory_space<vmem>>, vector<8x8xf32>,
    return
  }
  func.func @transform_0(%arg0: i32) -> (i32, i32) {
    %c0_i32 = arith.constant 0 : i32
    %c0_i32_0 = arith.constant 0 : i32
    return %arg0, %c0_i32 : i32, i32
  }
  func.func @transform_1(%arg0: i32) -> (i32, i32) {
    %c0_i32 = arith.constant 0 : i32
    %c0_i32_0 = arith.constant 0 : i32
    %c0_i32_1 = arith.constant 0 : i32
    return %c0_i32, %c0_i32_0 : i32, i32
  }
  func.func @transform_2(%arg0: i32) -> (i32, i32) {
    %c0_i32 = arith.constant 0 : i32
    %c0_i32_0 = arith.constant 0 : i32
    %c0_i32_1 = arith.constant 0 : i32
    return %c0_i32, %c0_i32_0 : i32, i32
  }
  func.func @transform_3(%arg0: i32) -> (i32, i32) {
    %c0_i32 = arith.constant 0 : i32
    %c0_i32_0 = arith.constant 0 : i32
    %c0_i32_1 = arith.constant 0 : i32
    return %c0_i32, %c0_i32_0 : i32, i32
  }
  func.func @transform_4(%arg0: i32) -> (i32, i32) {
    %c0_i32 = arith.constant 0 : i32
    %c0_i32_0 = arith.constant 0 : i32
    %c0_i32_1 = arith.constant 0 : i32
    return %c0_i32, %c0_i32_0 : i32, i32
  }
  func.func @transform_5(%arg0: i32) -> (i32, i32) {
    %c0_i32 = arith.constant 0 : i32
    %c0_i32_0 = arith.constant 0 : i32
    %c0_i32_1 = arith.constant 0 : i32
    return %c0_i32, %c0_i32_0 : i32, i32
  }
  func.func @transform_6(%arg0: i32) -> (i32, i32) {
    %c0_i32 = arith.constant 0 : i32
    %c0_i32_0 = arith.constant 0 : i32
    %c0_i32_1 = arith.constant 0 : i32
    return %c0_i32, %c0_i32_0 : i32, i32
  }
  func.func @transform_7(%arg0: i32) -> (i32, i32) {
    %c0_i32 = arith.constant 0 : i32
    %c0_i32_0 = arith.constant 0 : i32
    return %arg0, %c0_i32 : i32, i32
  }
}

</mosaic_0001>

<llo_original>
// kernel: dqn_forward.1
$region0: #{dqn_forward.1}
  #allocation0 [shape = 'u32[]', space=smem, size = 0x4, offset = 0x4, fixed_abs, tag = 'smem constant byte address 0x4 - core index']
  #allocation1 [shape = 'u32[144,128]{1,0:T(1,128)}', space=vmem, size = 0x12000, scoped, tag = 'internal scratch']
  %s0 = inlined_call_operand.vmem [shape: f32[8,8], index: 0, kind: input, shape index: {}]
  %s1 = inlined_call_operand.vmem [shape: bf16[8,128], index: 1, kind: input, shape index: {}]
  %s2 = inlined_call_operand.vmem [shape: f32[1,128], index: 2, kind: input, shape index: {}]
  %s3 = inlined_call_operand.vmem [shape: bf16[128,128], index: 3, kind: input, shape index: {}]
  %s4 = inlined_call_operand.vmem [shape: f32[1,128], index: 4, kind: input, shape index: {}]
  %s5 = inlined_call_operand.vmem [shape: bf16[128,8], index: 5, kind: input, shape index: {}]
  %s6 = inlined_call_operand.vmem [shape: f32[1,8], index: 6, kind: input, shape index: {}]
  %s7 = inlined_call_operand.vmem [shape: f32[8,8], index: 7, kind: output, shape index: {}]
  %s8 = sld [smem:[#allocation0]]
  $region38: #{dqn_forward.1} parent=0
    _
  %s10 = ssub.s32 1, %s8
  %s11 = scalar_select 0, %s10, %s8
  // Predicated region
  $region2: #{dqn_forward.1} parent=0 // pred_check
    _
  $region3: #{dqn_forward.1} parent=0 // pred_check_branch
    %13 = sbr.rel (0) target = $region5
  $region4: #{dqn_forward.1} parent=0 // pred_region
    _
  $region5: #{dqn_forward.1} parent=0 // pred_fallthru
    _
  // Predicated region
  $region6: #{dqn_forward.1} parent=0 // pred_check
    _
  $region7: #{dqn_forward.1} parent=0 // pred_check_branch
    %15 = sbr.rel (0) target = $region9
  $region8: #{dqn_forward.1} parent=0 // pred_region
    _
  $region9: #{dqn_forward.1} parent=0 // pred_fallthru
    _
  // Predicated region
  $region10: #{dqn_forward.1} parent=0 // pred_check
    _
  $region11: #{dqn_forward.1} parent=0 // pred_check_branch
    %17 = sbr.rel (0) target = $region13
  $region12: #{dqn_forward.1} parent=0 // pred_region
    _
  $region13: #{dqn_forward.1} parent=0 // pred_fallthru
    _
  // Predicated region
  $region14: #{dqn_forward.1} parent=0 // pred_check
    _
  $region15: #{dqn_forward.1} parent=0 // pred_check_branch
    %19 = sbr.rel (0) target = $region17
  $region16: #{dqn_forward.1} parent=0 // pred_region
    _
  $region17: #{dqn_forward.1} parent=0 // pred_fallthru
    _
  // Predicated region
  $region18: #{dqn_forward.1} parent=0 // pred_check
    _
  $region19: #{dqn_forward.1} parent=0 // pred_check_branch
    %21 = sbr.rel (0) target = $region21
  $region20: #{dqn_forward.1} parent=0 // pred_region
    _
  $region21: #{dqn_forward.1} parent=0 // pred_fallthru
    _
  // Predicated region
  $region22: #{dqn_forward.1} parent=0 // pred_check
    _
  $region23: #{dqn_forward.1} parent=0 // pred_check_branch
    %23 = sbr.rel (0) target = $region25
  $region24: #{dqn_forward.1} parent=0 // pred_region
    _
  $region25: #{dqn_forward.1} parent=0 // pred_fallthru
    _
  // Predicated region
  $region26: #{dqn_forward.1} parent=0 // pred_check
    _
  $region27: #{dqn_forward.1} parent=0 // pred_check_branch
    %25 = sbr.rel (0) target = $region29
  $region28: #{dqn_forward.1} parent=0 // pred_region
    _
  $region29: #{dqn_forward.1} parent=0 // pred_fallthru
    _
  %v27 = vld [vmem:[%s0] sm:$0xff]
  %v28 = vpack.c.bf16 %v27, %v27
  %v29 = vld [vmem:[%s1] sm:$0xf]
  %v30 = vld [vmem:[%s2] sm:$0x1]
  %v32 = vlaneseq
  %v33 = vshrl.u32 %v32, 7
  %v34 = vsub.s32 0, %v33
  %v35 = vrot.slane %v30, %v34
  %vm37 = vcmask 64512
  %v39 = vsel %vm37, %v28, 0
  %vm41 = vcmask 1043456
  %v43 = vsel %vm41, %v29, 0
  %45 = vmatprep.subr.bf16.mxu0 0
  %46 = vmatpush1.bf16.msra.mxu0 %v43
  %47 = vmatprep.subr.bf16.mxu0 0
  %48 = vmatpush1.bf16.msra.mxu0 0
  %49 = vmatprep.subr.bf16.mxu0 0
  %50 = vmatpush1.bf16.msra.mxu0 0
  %51 = vmatprep.subr.bf16.mxu0 0
  %52 = vmatpush1.bf16.msra.mxu0 0
  %53 = vmatprep.subr.bf16.mxu0 0
  %54 = vmatpush1.bf16.msra.mxu0 0
  %55 = vmatprep.subr.bf16.mxu0 0
  %56 = vmatpush1.bf16.msra.mxu0 0
  %57 = vmatprep.subr.bf16.mxu0 0
  %58 = vmatpush1.bf16.msra.mxu0 0
  %59 = vmatprep.subr.bf16.mxu0 0
  %60 = vmatpush1.bf16.msra.mxu0 0
  %61 = vmatprep.subr.bf16.mxu0 0
  %62 = vmatpush1.bf16.msra.mxu0 0
  %63 = vmatprep.subr.bf16.mxu0 0
  %64 = vmatpush1.bf16.msra.mxu0 0
  %65 = vmatprep.subr.bf16.mxu0 0
  %66 = vmatpush1.bf16.msra.mxu0 0
  %67 = vmatprep.subr.bf16.mxu0 0
  %68 = vmatpush1.bf16.msra.mxu0 0
  %69 = vmatprep.subr.bf16.mxu0 0
  %70 = vmatpush1.bf16.msra.mxu0 0
  %71 = vmatprep.subr.bf16.mxu0 0
  %72 = vmatpush1.bf16.msra.mxu0 0
  %73 = vmatprep.subr.bf16.mxu0 0
  %74 = vmatpush1.bf16.msra.mxu0 0
  %75 = vmatprep.subr.bf16.mxu0 0
  %76 = vmatpush1.bf16.msra.mxu0 0
  %77 = vmatprep.mubr.bf16.mxu0 0
  %78 = vmatmul.mubr.bf16.gmra.mrb[0].mxu0 %v39
  %v79 = vpop.f32.mrb[0].mxu0
  %v80 = vadd.f32 %v35, %v79
  %v81 = vpop.f32.mrb[0].mxu0
  %v82 = vpop.f32.mrb[0].mxu0
  %v83 = vpop.f32.mrb[0].mxu0
  %84 = vdwg.mxu0
  %v85 = vmax.f32 %v80, 0.0
  %v86 = vpack.c.bf16 %v85, %v85
  %v87 = vld [vmem:[%s3] sm:$0xf]
  %v88 = vld [vmem:[%s3 + $0x4] sm:$0xf]
  %v89 = vld [vmem:[%s3 + $0x8] sm:$0xf]
  %v90 = vld [vmem:[%s3 + $0xc] sm:$0xf]
  %v91 = vld [vmem:[%s3 + $0x10] sm:$0xf]
  %v92 = vld [vmem:[%s3 + $0x14] sm:$0xf]
  %v93 = vld [vmem:[%s3 + $0x18] sm:$0xf]
  %v94 = vld [vmem:[%s3 + $0x1c] sm:$0xf]
  %v95 = vld [vmem:[%s3 + $0x20] sm:$0xf]
  %v96 = vld [vmem:[%s3 + $0x24] sm:$0xf]
  %v97 = vld [vmem:[%s3 + $0x28] sm:$0xf]
  %v98 = vld [vmem:[%s3 + $0x2c] sm:$0xf]
  %v99 = vld [vmem:[%s3 + $0x30] sm:$0xf]
  %v100 = vld [vmem:[%s3 + $0x34] sm:$0xf]
  %v101 = vld [vmem:[%s3 + $0x38] sm:$0xf]
  %v102 = vld [vmem:[%s3 + $0x3c] sm:$0xf]
  %v103 = vld [vmem:[%s4] sm:$0x1]
  %v105 = vlaneseq
  %v106 = vshrl.u32 %v105, 7
  %v107 = vsub.s32 0, %v106
  %v108 = vrot.slane %v103, %v107
  %v126 = vunpack.c.l.b16 %v87
  %v127 = vunpack.c.l.b16 %v88
  %v128 = vunpack.c.l.b16 %v89
  %v129 = vunpack.c.l.b16 %v90
  %v130 = vunpack.c.l.b16 %v91
  %v131 = vunpack.c.l.b16 %v92
  %v132 = vunpack.c.l.b16 %v93
  %v133 = vunpack.c.l.b16 %v94
  %v134 = vunpack.c.l.b16 %v95
  %v135 = vunpack.c.l.b16 %v96
  %v136 = vunpack.c.l.b16 %v97
  %v137 = vunpack.c.l.b16 %v98
  %v138 = vunpack.c.l.b16 %v99
  %v139 = vunpack.c.l.b16 %v100
  %v140 = vunpack.c.l.b16 %v101
  %v141 = vunpack.c.l.b16 %v102
  %v142 = vpack.c.b16 %v127, %v126
  %v143 = vpack.c.b16 %v129, %v128
  %v144 = vpack.c.b16 %v131, %v130
  %v145 = vpack.c.b16 %v133, %v132
  %v146 = vpack.c.b16 %v135, %v134
  %v147 = vpack.c.b16 %v137, %v136
  %v148 = vpack.c.b16 %v139, %v138
  %v149 = vpack.c.b16 %v141, %v140
  %158 = vmatprep.subr.bf16.mxu0 0
  %159 = vmatpush1.bf16.msra.mxu0 %v142
  %160 = vmatprep.subr.bf16.mxu0 0
  %161 = vmatpush1.bf16.msra.mxu0 %v143
  %162 = vmatprep.subr.bf16.mxu0 0
  %163 = vmatpush1.bf16.msra.mxu0 %v144
  %164 = vmatprep.subr.bf16.mxu0 0
  %165 = vmatpush1.bf16.msra.mxu0 %v145
  %166 = vmatprep.subr.bf16.mxu0 0
  %167 = vmatpush1.bf16.msra.mxu0 %v146
  %168 = vmatprep.subr.bf16.mxu0 0
  %169 = vmatpush1.bf16.msra.mxu0 %v147
  %170 = vmatprep.subr.bf16.mxu0 0
  %171 = vmatpush1.bf16.msra.mxu0 %v148
  %172 = vmatprep.subr.bf16.mxu0 0
  %173 = vmatpush1.bf16.msra.mxu0 %v149
  %174 = vmatprep.subr.bf16.mxu0 0
  %175 = vmatpush1.bf16.msra.mxu0 0
  %176 = vmatprep.subr.bf16.mxu0 0
  %177 = vmatpush1.bf16.msra.mxu0 0
  %178 = vmatprep.subr.bf16.mxu0 0
  %179 = vmatpush1.bf16.msra.mxu0 0
  %180 = vmatprep.subr.bf16.mxu0 0
  %181 = vmatpush1.bf16.msra.mxu0 0
  %182 = vmatprep.subr.bf16.mxu0 0
  %183 = vmatpush1.bf16.msra.mxu0 0
  %184 = vmatprep.subr.bf16.mxu0 0
  %185 = vmatpush1.bf16.msra.mxu0 0
  %186 = vmatprep.subr.bf16.mxu0 0
  %187 = vmatpush1.bf16.msra.mxu0 0
  %188 = vmatprep.subr.bf16.mxu0 0
  %189 = vmatpush1.bf16.msra.mxu0 0
  %190 = vmatprep.mubr.bf16.mxu0 0
  %191 = vmatmul.mubr.bf16.gmra.mrb[0].mxu0 %v86
  %v192 = vpop.f32.mrb[0].mxu0
  %v193 = vadd.f32 %v108, %v192
  %v194 = vpop.f32.mrb[0].mxu0
  %v195 = vpop.f32.mrb[0].mxu0
  %v196 = vpop.f32.mrb[0].mxu0
  %197 = vdwg.mxu0
  %v198 = vmax.f32 %v193, 0.0
  %v199 = vpack.c.bf16 %v198, %v198
  %v200 = vld [vmem:[%s5] sm:$0xf]
  %v201 = vld [vmem:[%s5 + $0x4] sm:$0xf]
  %v202 = vld [vmem:[%s5 + $0x8] sm:$0xf]
  %v203 = vld [vmem:[%s5 + $0xc] sm:$0xf]
  %v204 = vld [vmem:[%s5 + $0x10] sm:$0xf]
  %v205 = vld [vmem:[%s5 + $0x14] sm:$0xf]
  %v206 = vld [vmem:[%s5 + $0x18] sm:$0xf]
  %v207 = vld [vmem:[%s5 + $0x1c] sm:$0xf]
  %v208 = vld [vmem:[%s5 + $0x20] sm:$0xf]
  %v209 = vld [vmem:[%s5 + $0x24] sm:$0xf]
  %v210 = vld [vmem:[%s5 + $0x28] sm:$0xf]
  %v211 = vld [vmem:[%s5 + $0x2c] sm:$0xf]
  %v212 = vld [vmem:[%s5 + $0x30] sm:$0xf]
  %v213 = vld [vmem:[%s5 + $0x34] sm:$0xf]
  %v214 = vld [vmem:[%s5 + $0x38] sm:$0xf]
  %v215 = vld [vmem:[%s5 + $0x3c] sm:$0xf]
  %v216 = vld [vmem:[%s6] sm:$0x1]
  %v218 = vlaneseq
  %v219 = vshrl.u32 %v218, 7
  %v220 = vsub.s32 0, %v219
  %v221 = vrot.slane %v216, %v220
  %v239 = vunpack.c.l.b16 %v200
  %v240 = vunpack.c.l.b16 %v201
  %v241 = vunpack.c.l.b16 %v202
  %v242 = vunpack.c.l.b16 %v203
  %v243 = vunpack.c.l.b16 %v204
  %v244 = vunpack.c.l.b16 %v205
  %v245 = vunpack.c.l.b16 %v206
  %v246 = vunpack.c.l.b16 %v207
  %v247 = vunpack.c.l.b16 %v208
  %v248 = vunpack.c.l.b16 %v209
  %v249 = vunpack.c.l.b16 %v210
  %v250 = vunpack.c.l.b16 %v211
  %v251 = vunpack.c.l.b16 %v212
  %v252 = vunpack.c.l.b16 %v213
  %v253 = vunpack.c.l.b16 %v214
  %v254 = vunpack.c.l.b16 %v215
  %v255 = vpack.c.b16 %v240, %v239
  %v256 = vpack.c.b16 %v242, %v241
  %v257 = vpack.c.b16 %v244, %v243
  %v258 = vpack.c.b16 %v246, %v245
  %v259 = vpack.c.b16 %v248, %v247
  %v260 = vpack.c.b16 %v250, %v249
  %v261 = vpack.c.b16 %v252, %v251
  %v262 = vpack.c.b16 %v254, %v253
  %271 = vmatprep.subr.bf16.mxu0 0
  %272 = vmatpush1.bf16.msra.mxu0 %v255
  %273 = vmatprep.subr.bf16.mxu0 0
  %274 = vmatpush1.bf16.msra.mxu0 %v256
  %275 = vmatprep.subr.bf16.mxu0 0
  %276 = vmatpush1.bf16.msra.mxu0 %v257
  %277 = vmatprep.subr.bf16.mxu0 0
  %278 = vmatpush1.bf16.msra.mxu0 %v258
  %279 = vmatprep.subr.bf16.mxu0 0
  %280 = vmatpush1.bf16.msra.mxu0 %v259
  %281 = vmatprep.subr.bf16.mxu0 0
  %282 = vmatpush1.bf16.msra.mxu0 %v260
  %283 = vmatprep.subr.bf16.mxu0 0
  %284 = vmatpush1.bf16.msra.mxu0 %v261
  %285 = vmatprep.subr.bf16.mxu0 0
  %286 = vmatpush1.bf16.msra.mxu0 %v262
  %287 = vmatprep.subr.bf16.mxu0 0
  %288 = vmatpush1.bf16.msra.mxu0 0
  %289 = vmatprep.subr.bf16.mxu0 0
  %290 = vmatpush1.bf16.msra.mxu0 0
  %291 = vmatprep.subr.bf16.mxu0 0
  %292 = vmatpush1.bf16.msra.mxu0 0
  %293 = vmatprep.subr.bf16.mxu0 0
  %294 = vmatpush1.bf16.msra.mxu0 0
  %295 = vmatprep.subr.bf16.mxu0 0
  %296 = vmatpush1.bf16.msra.mxu0 0
  %297 = vmatprep.subr.bf16.mxu0 0
  %298 = vmatpush1.bf16.msra.mxu0 0
  %299 = vmatprep.subr.bf16.mxu0 0
  %300 = vmatpush1.bf16.msra.mxu0 0
  %301 = vmatprep.subr.bf16.mxu0 0
  %302 = vmatpush1.bf16.msra.mxu0 0
  %303 = vmatprep.mubr.bf16.mxu0 0
  %304 = vmatmul.mubr.bf16.gmra.mrb[0].mxu0 %v199
  %v305 = vpop.f32.mrb[0].mxu0
  %v306 = vadd.f32 %v221, %v305
  %v307 = vpop.f32.mrb[0].mxu0
  %v308 = vpop.f32.mrb[0].mxu0
  %v309 = vpop.f32.mrb[0].mxu0
  %310 = vdwg.mxu0
  %311 = vst.msk [vmem:[%s7] sm:$0xff] %vm37, %v306
  // Predicated region
  $region30: #{dqn_forward.1} parent=0 // pred_check
    _
  $region31: #{dqn_forward.1} parent=0 // pred_check_branch
    %313 = sbr.rel (0) target = $region33
  $region32: #{dqn_forward.1} parent=0 // pred_region
    _
  $region33: #{dqn_forward.1} parent=0 // pred_fallthru
    _
  // Predicated region
  $region34: #{dqn_forward.1} parent=0 // pred_check
    _
  $region35: #{dqn_forward.1} parent=0 // pred_check_branch
    %315 = sbr.rel (0) target = $region37
  $region36: #{dqn_forward.1} parent=0 // pred_region
    _
  $region37: #{dqn_forward.1} parent=0 // pred_fallthru
    _

</llo_original>
